<compile_context>
chip_gen: v5e
topology: v5e:2x2
jax: 0.10.0
libtpu: 0.0.40
codegen_flags: <defaults>
</compile_context>

<pallas_src>
import jax
import jax.numpy as jnp
from jax.experimental import pallas as pl
from jax.experimental.pallas import tpu as pltpu


def policy_net_kernel(xt_ref, w1t_ref, w2t_ref, b2t_ref, out_ref):
    """Batch-in-lanes forward pass (columns = batch rows, all tiles lane-dense).

    xt_ref : (S+1, Bt)  x^T with a ones row appended (folds fc1 bias)
    w1t_ref: (H, S+1)   [w1; b1]^T
    w2t_ref: (A, H)     w2^T
    b2t_ref: (A, 1)     fc2 bias (broadcast along lanes)
    out_ref: (A, Bt)    softmax probabilities, transposed
    """
    # fc1 (+ bias via the ones row) on the MXU, ReLU on the VPU.
    h = jnp.dot(w1t_ref[...], xt_ref[...], preferred_element_type=jnp.float32)
    h = jnp.maximum(h, 0.0)                                        # (H, Bt)

    # fc2 on the MXU; the (A, 1) bias broadcast along lanes is negligible.
    logits = jnp.dot(w2t_ref[...], h, preferred_element_type=jnp.float32)
    logits = logits + b2t_ref[...]                                 # (A, Bt)

    A = out_ref.shape[0]
    if A == 2:
        # Exact 2-way softmax as a sigmoid: pure VPU/EUP, sums to 1 exactly.
        d = logits[1:2, :] - logits[0:1, :]
        p0 = 1.0 / (1.0 + jnp.exp(d))
        out_ref[0:1, :] = p0.astype(out_ref.dtype)
        out_ref[1:2, :] = (1.0 - p0).astype(out_ref.dtype)
    else:
        # Generic numerically-stable softmax over the (small) sublane axis.
        m = jnp.max(logits, axis=0, keepdims=True)
        e = jnp.exp(logits - m)
        out_ref[...] = (e / jnp.sum(e, axis=0, keepdims=True)).astype(out_ref.dtype)


def _ceil_div(a, b):
    return -(-a // b)


def _round_up(n, m):
    return _ceil_div(n, m) * m


def policy_net_forward(x, w1, b1, w2, b2, *, max_block_b=1024):
    """x: (B, S) f32; w1: (S, H); b1: (1, H); w2: (H, A); b2: (1, A) -> (B, A)."""
    B, S = x.shape
    H, A = w2.shape

    # Even batch split into lane-dense (multiple-of-128) blocks: padding is at
    # most one 128-lane granule per block.  Per-step footprint is <1 MiB even
    # at block_b=2048, so VMEM is never the constraint on any generation; keep
    # >= 2 grid steps for larger batches so v7x's two TensorCores both get work.
    n_blocks = _ceil_div(B, max_block_b)
    if n_blocks == 1 and B >= 512:
        n_blocks = 2
    block_b = _round_up(_ceil_div(B, n_blocks), 128)
    B_pad = n_blocks * block_b

    # Lane-dense, batch-in-lanes inputs.  The ones row folds the fc1 bias into
    # the matmul so the kernel never lane-broadcasts a (1, H) bias.
    xt = jnp.concatenate([x, jnp.ones((B, 1), x.dtype)], axis=1).T   # (S+1, B)
    if B_pad != B:
        xt = jnp.pad(xt, ((0, 0), (0, B_pad - B)))
    w1t = jnp.concatenate([w1, b1], axis=0).T                        # (H, S+1)
    w2t = w2.T                                                       # (A, H)
    b2t = b2.T                                                       # (A, 1)
    # TODO(synk): optionally cast xt/w1t/w2t to bfloat16 for the v5e/v6e MXU if
    # the small precision loss is acceptable for the policy head.

    grid = (n_blocks,)
    flops = 2 * B_pad * ((S + 1) * H + H * A)
    bytes_accessed = 4 * ((S + 1) * B_pad + H * (S + 1) + A * H + A + A * B_pad)

    out_t = pl.pallas_call(
        policy_net_kernel,
        out_shape=jax.ShapeDtypeStruct((A, B_pad), jnp.float32),
        grid=grid,
        in_specs=[
            pl.BlockSpec((S + 1, block_b), lambda i: (0, i)),   # x^T: tiled over batch lanes
            pl.BlockSpec((H, S + 1), lambda i: (0, 0)),         # [w1;b1]^T: resident
            pl.BlockSpec((A, H), lambda i: (0, 0)),             # w2^T: resident
            pl.BlockSpec((A, 1), lambda i: (0, 0)),             # b2^T: resident
        ],
        out_specs=pl.BlockSpec((A, block_b), lambda i: (0, i)),
        compiler_params=pltpu.CompilerParams(
            dimension_semantics=("parallel",)),
        cost_estimate=pl.CostEstimate(
            flops=flops,
            transcendentals=B_pad * A,
            bytes_accessed=bytes_accessed),
    )(xt, w1t, w2t, b2t)

    # Back to the module's (B, A) layout; drop the padded batch columns.
    return out_t.T[:B]


def init_params(key, state_dim, hidden_dim, action_dim):
    """Deterministic init mimicking torch.nn.Linear default (U[-1/sqrt(in), 1/sqrt(in)])."""
    k1, k2, k3, k4 = jax.random.split(key, 4)
    bound1 = 1.0 / jnp.sqrt(jnp.float32(state_dim))
    bound2 = 1.0 / jnp.sqrt(jnp.float32(hidden_dim))
    # stored as (in, out) so the math is x @ W + b
    w1 = jax.random.uniform(k1, (state_dim, hidden_dim), jnp.float32, -bound1, bound1)
    b1 = jax.random.uniform(k2, (1, hidden_dim), jnp.float32, -bound1, bound1)
    w2 = jax.random.uniform(k3, (hidden_dim, action_dim), jnp.float32, -bound2, bound2)
    b2 = jax.random.uniform(k4, (1, action_dim), jnp.float32, -bound2, bound2)
    return w1, b1, w2, b2


if __name__ == "__main__":
    # Small shapes consistent with the module: Pendulum-like state_dim=3,
    # hidden_dim=128 (as in the chapter), a small discrete action_dim=2, batch=8.
    batch, state_dim, hidden_dim, action_dim = 8, 3, 128, 2

    key = jax.random.PRNGKey(0)
    k_x, k_p = jax.random.split(key)
    x = jax.random.normal(k_x, (batch, state_dim), dtype=jnp.float32)
    w1, b1, w2, b2 = init_params(k_p, state_dim, hidden_dim, action_dim)

    probs = policy_net_forward(x, w1, b1, w2, b2)
    probs = jax.block_until_ready(probs)

    # Sanity check against a pure-JAX reference (computed at highest precision).
    h_ref = jnp.maximum(
        jnp.dot(x, w1, precision=jax.lax.Precision.HIGHEST) + b1, 0.0)
    logits_ref = jnp.dot(h_ref, w2, precision=jax.lax.Precision.HIGHEST) + b2
    ref = jax.nn.softmax(logits_ref, axis=1)

    assert probs.shape == (batch, action_dim)
    assert jnp.allclose(probs, ref, atol=2e-3), "mismatch vs reference"
    assert jnp.allclose(jnp.sum(probs, axis=1), 1.0, atol=1e-6)

    print("KERNEL_OK")
</pallas_src>

<mosaic_0001>
module attributes {stable_mosaic.version = 11 : i64} {
  func.func @policy_net_kernel(%arg0: i32, %arg1: memref<4x128xf32, #tpu.memory_space<vmem>>, %arg2: memref<128x4xf32, #tpu.memory_space<vmem>>, %arg3: memref<2x128xf32, #tpu.memory_space<vmem>>, %arg4: memref<2x1xf32, #tpu.memory_space<vmem>>, %arg5: memref<2x128xf32, #tpu.memory_space<vmem>>) attributes {dimension_semantics = [#tpu.dimension_semantics<parallel>], iteration_bounds = array<i64: 1>, scalar_prefetch = 0 : i64, scratch_operands = 0 : i64, tpu.core_type = #tpu.core_type<tc>, window_params = [{transform_indices = @transform_0, window_bounds = array<i64: 4, 128>}, {pipeline_mode = #tpu.pipeline_mode<synchronous>, transform_indices = @transform_1, window_bounds = array<i64: 128, 4>}, {pipeline_mode = #tpu.pipeline_mode<synchronous>, transform_indices = @transform_2, window_bounds = array<i64: 2, 128>}, {pipeline_mode = #tpu.pipeline_mode<synchronous>, transform_indices = @transform_3, window_bounds = array<i64: 2, 1>}, {transform_indices = @transform_4, window_bounds = array<i64: 2, 128>}]} {
    %c0 = arith.constant 0 : index
    %c0_0 = arith.constant 0 : index
    %0 = vector.load %arg2[%c0, %c0_0] : memref<128x4xf32, #tpu.memory_space<vmem>>, vector<128x4xf32>
    %c0_1 = arith.constant 0 : index
    %c0_2 = arith.constant 0 : index
    %1 = vector.load %arg1[%c0_1, %c0_2] : memref<4x128xf32, #tpu.memory_space<vmem>>, vector<4x128xf32>
    %cst = arith.constant dense<0.000000e+00> : vector<128x128xf32>
    %2 = tpu.matmul %0, %1, %cst {dimension_numbers = #tpu.dot_dimension_numbers<[1], [0], [0], [1], [0, 0, 1, 1], [], []>} : vector<128x4xf32>, vector<4x128xf32>, vector<128x128xf32> -> vector<128x128xf32>
    %cst_3 = arith.constant 0.000000e+00 : f32
    %3 = vector.broadcast %cst_3 : f32 to vector<128x128xf32>
    %4 = arith.maximumf %2, %3 : vector<128x128xf32>
    %c0_4 = arith.constant 0 : index
    %c0_5 = arith.constant 0 : index
    %5 = vector.load %arg3[%c0_4, %c0_5] : memref<2x128xf32, #tpu.memory_space<vmem>>, vector<2x128xf32>
    %cst_6 = arith.constant dense<0.000000e+00> : vector<2x128xf32>
    %6 = tpu.matmul %5, %4, %cst_6 {dimension_numbers = #tpu.dot_dimension_numbers<[1], [0], [0], [1], [0, 0, 1, 1], [], []>} : vector<2x128xf32>, vector<128x128xf32>, vector<2x128xf32> -> vector<2x128xf32>
    %c0_7 = arith.constant 0 : index
    %c0_8 = arith.constant 0 : index
    %7 = vector.load %arg4[%c0_7, %c0_8] : memref<2x1xf32, #tpu.memory_space<vmem>>, vector<2x1xf32>
    %8 = vector.broadcast %7 : vector<2x1xf32> to vector<2x128xf32>
    %9 = arith.addf %6, %8 : vector<2x128xf32>
    %10 = vector.extract_strided_slice %9 {offsets = [1, 0], sizes = [1, 128], strides = [1, 1]} : vector<2x128xf32> to vector<1x128xf32>
    %11 = vector.extract_strided_slice %9 {offsets = [0, 0], sizes = [1, 128], strides = [1, 1]} : vector<2x128xf32> to vector<1x128xf32>
    %12 = arith.subf %10, %11 : vector<1x128xf32>
    %13 = math.exp %12 : vector<1x128xf32>
    %cst_9 = arith.constant 1.000000e+00 : f32
    %14 = vector.broadcast %cst_9 : f32 to vector<1x128xf32>
    %15 = arith.addf %14, %13 : vector<1x128xf32>
    %cst_10 = arith.constant 1.000000e+00 : f32
    %16 = vector.broadcast %cst_10 : f32 to vector<1x128xf32>
    %17 = arith.divf %16, %15 : vector<1x128xf32>
    %c0_11 = arith.constant 0 : index
    %c0_12 = arith.constant 0 : index
    %18 = vector.load %arg5[%c0_11, %c0_12] : memref<2x128xf32, #tpu.memory_space<vmem>>, vector<1x128xf32>
    tpu.vector_store %arg5[%c0_11, %c0_12], %17 {strides = array<i32>} : memref<2x128xf32, #tpu.memory_space<vmem>>, vector<1x128xf32>,
    %cst_13 = arith.constant 1.000000e+00 : f32
    %19 = vector.broadcast %cst_13 : f32 to vector<1x128xf32>
    %20 = arith.subf %19, %17 : vector<1x128xf32>
    %c1 = arith.constant 1 : index
    %c0_14 = arith.constant 0 : index
    %21 = vector.load %arg5[%c1, %c0_14] : memref<2x128xf32, #tpu.memory_space<vmem>>, vector<1x128xf32>
    tpu.vector_store %arg5[%c1, %c0_14], %20 {strides = array<i32>} : memref<2x128xf32, #tpu.memory_space<vmem>>, vector<1x128xf32>,
    return
  }
  func.func @transform_0(%arg0: i32) -> (i32, i32) {
    %c0_i32 = arith.constant 0 : i32
    %c0_i32_0 = arith.constant 0 : i32
    return %c0_i32, %arg0 : i32, i32
  }
  func.func @transform_1(%arg0: i32) -> (i32, i32) {
    %c0_i32 = arith.constant 0 : i32
    %c0_i32_0 = arith.constant 0 : i32
    %c0_i32_1 = arith.constant 0 : i32
    return %c0_i32, %c0_i32_0 : i32, i32
  }
  func.func @transform_2(%arg0: i32) -> (i32, i32) {
    %c0_i32 = arith.constant 0 : i32
    %c0_i32_0 = arith.constant 0 : i32
    %c0_i32_1 = arith.constant 0 : i32
    return %c0_i32, %c0_i32_0 : i32, i32
  }
  func.func @transform_3(%arg0: i32) -> (i32, i32) {
    %c0_i32 = arith.constant 0 : i32
    %c0_i32_0 = arith.constant 0 : i32
    %c0_i32_1 = arith.constant 0 : i32
    return %c0_i32, %c0_i32_0 : i32, i32
  }
  func.func @transform_4(%arg0: i32) -> (i32, i32) {
    %c0_i32 = arith.constant 0 : i32
    %c0_i32_0 = arith.constant 0 : i32
    return %c0_i32, %arg0 : i32, i32
  }
}

</mosaic_0001>

<llo_original>
// kernel: tpu_custom_call.1
$region0: #{tpu_custom_call.1}
  #allocation0 [shape = 'u32[]', space=smem, size = 0x4, offset = 0x4, fixed_abs, tag = 'smem constant byte address 0x4 - core index']
  #allocation1 [shape = 'u32[72,128]{1,0:T(1,128)}', space=vmem, size = 0x9000, scoped, tag = 'internal scratch']
  %s0 = inlined_call_operand.vmem [shape: f32[4,128], index: 0, kind: input, shape index: {}]
  %s1 = inlined_call_operand.vmem [shape: f32[128,4], index: 1, kind: input, shape index: {}]
  %s2 = inlined_call_operand.vmem [shape: f32[2,128], index: 2, kind: input, shape index: {}]
  %s3 = inlined_call_operand.vmem [shape: f32[2,1], index: 3, kind: input, shape index: {}]
  %s4 = inlined_call_operand.hbm [shape: f32[2,128], index: 4, kind: output, shape index: {}]
  %s5 = sld [smem:[#allocation0]]
  $region26: #{tpu_custom_call.1} parent=0
    _
  %s7 = ssub.s32 1, %s5
  %s8 = scalar_select 0, %s7, %s5
  $region1: #{tpu_custom_call.1} parent=0
    #allocation2 [shape = 'u8[1024]{0}', space=vmem, size = 0x400, scoped, tag = 'output window, operand 0, single buffered']
    #allocation3 [shape = 's32[1]{0}', space=sflag, size = 0x4, scoped, tag = 'scoped memory for tpu_custom_call.1']
    %9 = vsyncpa [#allocation3], 0
    // Predicated region
    $region2: #{tpu_custom_call.1} parent=1 // pred_check
      _
    $region3: #{tpu_custom_call.1} parent=1 // pred_check_branch
      %11 = sbr.rel (0) target = $region5
    $region4: #{tpu_custom_call.1} parent=1 // pred_region
      _
    $region5: #{tpu_custom_call.1} parent=1 // pred_fallthru
      _
    // Predicated region
    $region6: #{tpu_custom_call.1} parent=1 // pred_check
      _
    $region7: #{tpu_custom_call.1} parent=1 // pred_check_branch
      %13 = sbr.rel (0) target = $region9
    $region8: #{tpu_custom_call.1} parent=1 // pred_region
      _
    $region9: #{tpu_custom_call.1} parent=1 // pred_fallthru
      _
    // Predicated region
    $region10: #{tpu_custom_call.1} parent=1 // pred_check
      _
    $region11: #{tpu_custom_call.1} parent=1 // pred_check_branch
      %15 = sbr.rel (0) target = $region13
    $region12: #{tpu_custom_call.1} parent=1 // pred_region
      _
    $region13: #{tpu_custom_call.1} parent=1 // pred_fallthru
      _
    // Predicated region
    $region14: #{tpu_custom_call.1} parent=1 // pred_check
      _
    $region15: #{tpu_custom_call.1} parent=1 // pred_check_branch
      %17 = sbr.rel (0) target = $region17
    $region16: #{tpu_custom_call.1} parent=1 // pred_region
      _
    $region17: #{tpu_custom_call.1} parent=1 // pred_fallthru
      _
    %v18 = vld [vmem:[%s1] sm:$0xff]
    %v19 = vld [vmem:[%s1 + $0x8] sm:$0xff]
    %v20 = vld [vmem:[%s1 + $0x10] sm:$0xff]
    %v21 = vld [vmem:[%s1 + $0x18] sm:$0xff]
    %v22 = vld [vmem:[%s1 + $0x20] sm:$0xff]
    %v23 = vld [vmem:[%s1 + $0x28] sm:$0xff]
    %v24 = vld [vmem:[%s1 + $0x30] sm:$0xff]
    %v25 = vld [vmem:[%s1 + $0x38] sm:$0xff]
    %v26 = vld [vmem:[%s1 + $0x40] sm:$0xff]
    %v27 = vld [vmem:[%s1 + $0x48] sm:$0xff]
    %v28 = vld [vmem:[%s1 + $0x50] sm:$0xff]
    %v29 = vld [vmem:[%s1 + $0x58] sm:$0xff]
    %v30 = vld [vmem:[%s1 + $0x60] sm:$0xff]
    %v31 = vld [vmem:[%s1 + $0x68] sm:$0xff]
    %v32 = vld [vmem:[%s1 + $0x70] sm:$0xff]
    %v33 = vld [vmem:[%s1 + $0x78] sm:$0xff]
    %v34 = vld [vmem:[%s0] sm:$0xf]
    %vm35 = vcmask 31744
    %v37 = vsel %vm35, %v18, 0
    %v40 = vsel %vm35, %v19, 0
    %v43 = vsel %vm35, %v20, 0
    %v46 = vsel %vm35, %v21, 0
    %v49 = vsel %vm35, %v22, 0
    %v52 = vsel %vm35, %v23, 0
    %v55 = vsel %vm35, %v24, 0
    %v58 = vsel %vm35, %v25, 0
    %v61 = vsel %vm35, %v26, 0
    %v64 = vsel %vm35, %v27, 0
    %v67 = vsel %vm35, %v28, 0
    %v70 = vsel %vm35, %v29, 0
    %v73 = vsel %vm35, %v30, 0
    %v76 = vsel %vm35, %v31, 0
    %v79 = vsel %vm35, %v32, 0
    %v82 = vsel %vm35, %v33, 0
    %vm84 = vcmask 1043456
    %v86 = vsel %vm84, %v34, 0
    %88 = vmatpush.msra.mxu0 0.0
    %89 = vmatpush.msra.mxu0 0.0
    %90 = vmatpush.msra.mxu0 0.0
    %91 = vmatpush.msra.mxu0 0.0
    %92 = vmatpush.msra.mxu0 0.0
    %93 = vmatpush.msra.mxu0 0.0
    %94 = vmatpush.msra.mxu0 0.0
    %95 = vmatpush.msra.mxu0 0.0
    %96 = vmatpush.msra.mxu0 0.0
    %97 = vmatpush.msra.mxu0 0.0
    %98 = vmatpush.msra.mxu0 0.0
    %99 = vmatpush.msra.mxu0 0.0
    %100 = vmatpush.msra.mxu0 0.0
    %101 = vmatpush.msra.mxu0 0.0
    %102 = vmatpush.msra.mxu0 0.0
    %103 = vmatpush.msra.mxu0 %v86
    %104 = vmatmul.f32.gmra.mxu0 %v37
    %v105 = vpop.f32.mrf.mxu0
    %v106 = vadd.f32 0.0, %v105
    %107 = vmatmul.f32.gmra.mxu0 %v40
    %v108 = vpop.f32.mrf.mxu0
    %v109 = vadd.f32 0.0, %v108
    %110 = vmatmul.f32.gmra.mxu0 %v43
    %v111 = vpop.f32.mrf.mxu0
    %v112 = vadd.f32 0.0, %v111
    %113 = vmatmul.f32.gmra.mxu0 %v46
    %v114 = vpop.f32.mrf.mxu0
    %v115 = vadd.f32 0.0, %v114
    %116 = vmatmul.f32.gmra.mxu0 %v49
    %v117 = vpop.f32.mrf.mxu0
    %v118 = vadd.f32 0.0, %v117
    %119 = vmatmul.f32.gmra.mxu0 %v52
    %v120 = vpop.f32.mrf.mxu0
    %v121 = vadd.f32 0.0, %v120
    %122 = vmatmul.f32.gmra.mxu0 %v55
    %v123 = vpop.f32.mrf.mxu0
    %v124 = vadd.f32 0.0, %v123
    %125 = vmatmul.f32.gmra.mxu0 %v58
    %v126 = vpop.f32.mrf.mxu0
    %v127 = vadd.f32 0.0, %v126
    %128 = vmatmul.f32.gmra.mxu0 %v61
    %v129 = vpop.f32.mrf.mxu0
    %v130 = vadd.f32 0.0, %v129
    %131 = vmatmul.f32.gmra.mxu0 %v64
    %v132 = vpop.f32.mrf.mxu0
    %v133 = vadd.f32 0.0, %v132
    %134 = vmatmul.f32.gmra.mxu0 %v67
    %v135 = vpop.f32.mrf.mxu0
    %v136 = vadd.f32 0.0, %v135
    %137 = vmatmul.f32.gmra.mxu0 %v70
    %v138 = vpop.f32.mrf.mxu0
    %v139 = vadd.f32 0.0, %v138
    %140 = vmatmul.f32.gmra.mxu0 %v73
    %v141 = vpop.f32.mrf.mxu0
    %v142 = vadd.f32 0.0, %v141
    %143 = vmatmul.f32.gmra.mxu0 %v76
    %v144 = vpop.f32.mrf.mxu0
    %v145 = vadd.f32 0.0, %v144
    %146 = vmatmul.f32.gmra.mxu0 %v79
    %v147 = vpop.f32.mrf.mxu0
    %v148 = vadd.f32 0.0, %v147
    %149 = vmatmul.f32.gmra.mxu0 %v82
    %v150 = vpop.f32.mrf.mxu0
    %v151 = vadd.f32 0.0, %v150
    %152 = vdwg.mxu0
    %v153 = vmax.f32 %v106, 0.0
    %v154 = vmax.f32 %v109, 0.0
    %v155 = vmax.f32 %v112, 0.0
    %v156 = vmax.f32 %v115, 0.0
    %v157 = vmax.f32 %v118, 0.0
    %v158 = vmax.f32 %v121, 0.0
    %v159 = vmax.f32 %v124, 0.0
    %v160 = vmax.f32 %v127, 0.0
    %v161 = vmax.f32 %v130, 0.0
    %v162 = vmax.f32 %v133, 0.0
    %v163 = vmax.f32 %v136, 0.0
    %v164 = vmax.f32 %v139, 0.0
    %v165 = vmax.f32 %v142, 0.0
    %v166 = vmax.f32 %v145, 0.0
    %v167 = vmax.f32 %v148, 0.0
    %v168 = vmax.f32 %v151, 0.0
    %v169 = vld [vmem:[%s2] sm:$0x3]
    %v170 = vld [vmem:[%s3] sm:$0x3]
    %172 = vset.pattern.permute.xlu0 0
    %173 = vperm.xlu0 %172, %v170
    %v174 = vpop.permute.xlu0 %173
    %176 = vmatpush.msra.mxu0 %v168
    %177 = vmatpush.msra.mxu0 %v167
    %178 = vmatpush.msra.mxu0 %v166
    %179 = vmatpush.msra.mxu0 %v165
    %180 = vmatpush.msra.mxu0 %v164
    %181 = vmatpush.msra.mxu0 %v163
    %182 = vmatpush.msra.mxu0 %v162
    %183 = vmatpush.msra.mxu0 %v161
    %184 = vmatpush.msra.mxu0 %v160
    %185 = vmatpush.msra.mxu0 %v159
    %186 = vmatpush.msra.mxu0 %v158
    %187 = vmatpush.msra.mxu0 %v157
    %188 = vmatpush.msra.mxu0 %v156
    %189 = vmatpush.msra.mxu0 %v155
    %190 = vmatpush.msra.mxu0 %v154
    %191 = vmatpush.msra.mxu0 %v153
    %192 = vmatmul.f32.gmra.mxu0 %v169
    %v193 = vpop.f32.mrf.mxu0
    %v194 = vadd.f32 %v174, %v193
    %195 = vdwg.mxu0
    %v197 = vrot.slane %v194, 7
    %v199 = vsub.f32 %v194, %v197
    %v200 = vmul.f32 %v199, 1.442695
    %v201 = vpow.pop %v200
    %v202 = vadd.f32 %v201, 1.0
    %v203 = vrcp.pop %v202
    %v204 = vmul.f32 %v202, %v203
    %v205 = vsub.f32 1.0, %v204
    %v206 = vmul.f32 %v203, %v205
    %v207 = vadd.f32 %v203, %v206
    %vm208 = vweird.f32 %v202
    %vm209 = vweird.f32 %v203
    %vm210 = vmor %vm208, %vm209
    %v211 = vsel %vm210, %v203, %v207
    %v212 = vand.u32 2147483647, %v202
    %vm213 = vcmp.eq.f32.partialorder %v212, 8.507059e+37
    %v214 = vand.u32 %v202, 2147483648
    %v215 = vor.u32 1.1754944e-38, %v214
    %v216 = vsel %vm213, %v215, %v211
    %v217 = vmul.f32 1.0, %v216
    %218 = vst [vmem:[#allocation2 - $0x1] sm:$0x2] %v217
    %v219 = vsub.f32 1.0, %v217
    %220 = vst [vmem:[#allocation2] sm:$0x2] %v219
    // Predicated region
    $region18: #{tpu_custom_call.1} parent=1 // pred_check
      _
    $region19: #{tpu_custom_call.1} parent=1 // pred_check_branch
      %222 = sbr.rel (0) target = $region21
    $region20: #{tpu_custom_call.1} parent=1 // pred_region
      %224 = vsyncadd [#allocation3], 0
      %s226 = sshll.u32 [#allocation2], 4
      %s227 = int_to_ptr.vmem [resolvable:$true] %s226
      %s228 = sshll.u32 %s4, 4
      %s229 = int_to_ptr.hbm [resolvable:$true] %s228
      %231 = dma.vmem_to_hbm [thread:$0]  %s227, 32, %s229, [#allocation3]
    $region21: #{tpu_custom_call.1} parent=1 // pred_fallthru
      _
    // Predicated region
    $region22: #{tpu_custom_call.1} parent=1 // pred_check
      _
    $region23: #{tpu_custom_call.1} parent=1 // pred_check_branch
      %233 = sbr.rel (0) target = $region25
    $region24: #{tpu_custom_call.1} parent=1 // pred_region
      %235 = dma.done [#allocation3], 32
    $region25: #{tpu_custom_call.1} parent=1 // pred_fallthru
      _
    %236 = vsyncpa [#allocation3], 1

</llo_original>
